<compile_context>
chip_gen: v6e
topology: v6e:2x2x1
jax: 0.10.0
libtpu: 0.0.40
codegen_flags: <defaults>
</compile_context>

<pallas_src>
import jax
import jax.numpy as jnp
from jax.experimental import pallas as pl
from jax.experimental.pallas import tpu as pltpu

EPS = 1e-5
LANE = 128


def _round_up(x, m):
    return (x + m - 1) // m * m


# ---------------------------------------------------------------------------
# In-kernel math
# ---------------------------------------------------------------------------
def _mish(x):
    # mish(x) = x * tanh(softplus(x)) = x * (t^2 + 2t) / (t^2 + 2t + 2), t = e^x
    # Guard at x > 20 (mish(x) ~= x), matching PyTorch's softplus threshold and
    # avoiding overflow of t*t. Epilogue stays in f32 (v5e VPU/EUP have no bf16).
    t = jnp.exp(jnp.minimum(x, 20.0))
    u = t * (t + 2.0)
    soft = x * u * pl.reciprocal(u + 2.0, approx=True)
    return jnp.where(x > 20.0, x, soft)


def _matmul_shift_mish_kernel(p_ref, w_ref, shift_ref, o_ref):
    """out = Mish( (patches @ W_scaled) + shift )   [W already has BN scale folded]"""
    acc = jnp.dot(p_ref[...], w_ref[...], preferred_element_type=jnp.float32)
    o_ref[...] = _mish(acc + shift_ref[...]).astype(o_ref.dtype)


def _matmul_shift_add_mish_kernel(p_ref, w_ref, shift_ref, sc_ref, o_ref):
    """out = Mish( (patches @ W_scaled) + shift + shortcut )  (identity shortcut)"""
    acc = jnp.dot(p_ref[...], w_ref[...], preferred_element_type=jnp.float32)
    o_ref[...] = _mish(acc + shift_ref[...] + sc_ref[...]).astype(o_ref.dtype)


# ---------------------------------------------------------------------------
# Gridded Pallas wrapper (double-buffered over the M row dimension)
# ---------------------------------------------------------------------------
def _choose_block_m(m):
    # Largest convenient tile; 256 rows keeps VMEM use tiny (<4 MiB with
    # double-buffering) even at realistic channel counts -> safe on v7x 64 MiB.
    if m >= 256:
        return 256
    return _round_up(m, 16)  # bf16 sublane alignment


def fused_matmul_shift_mish(patches_bf16, w_bf16, shift_f32, *,
                            out_dtype, shortcut_f32=None):
    m, k = patches_bf16.shape
    cp = w_bf16.shape[1]
    bm = _choose_block_m(m)
    m_pad = _round_up(m, bm)
    if m_pad != m:
        patches_bf16 = jnp.pad(patches_bf16, ((0, m_pad - m), (0, 0)))
        if shortcut_f32 is not None:
            shortcut_f32 = jnp.pad(shortcut_f32, ((0, m_pad - m), (0, 0)))

    in_specs = [
        pl.BlockSpec((bm, k), lambda i: (i, 0)),   # patch rows (bf16)
        pl.BlockSpec((k, cp), lambda i: (0, 0)),   # weights, VMEM-resident (bf16)
        pl.BlockSpec((1, cp), lambda i: (0, 0)),   # per-channel shift (f32)
    ]
    args = [patches_bf16, w_bf16, shift_f32]
    kernel = _matmul_shift_mish_kernel
    if shortcut_f32 is not None:
        in_specs.append(pl.BlockSpec((bm, cp), lambda i: (i, 0)))
        args.append(shortcut_f32)
        kernel = _matmul_shift_add_mish_kernel

    out = pl.pallas_call(
        kernel,
        out_shape=jax.ShapeDtypeStruct((m_pad, cp), out_dtype),
        grid=(m_pad // bm,),
        in_specs=in_specs,
        out_specs=pl.BlockSpec((bm, cp), lambda i: (i, 0)),
        compiler_params=pltpu.CompilerParams(
            dimension_semantics=("parallel",),   # shard row blocks across v7x TCs
        ),
    )(*args)
    return out[:m]


# ---------------------------------------------------------------------------
# Plain-JAX glue: im2col, BN folding, parameter setup
# ---------------------------------------------------------------------------
def im2col_3x3(x_nhwc, stride):
    """(N,H,W,C) -> (N*Ho*Wo, 9*C), patch order (ki, kj, C), padding=1."""
    n, h, w, c = x_nhwc.shape
    xp = jnp.pad(x_nhwc, ((0, 0), (1, 1), (1, 1), (0, 0)))
    ho = (h + 2 - 3) // stride + 1
    wo = (w + 2 - 3) // stride + 1
    cols = []
    for ki in range(3):
        for kj in range(3):
            cols.append(xp[:, ki:ki + stride * ho:stride,
                            kj:kj + stride * wo:stride, :])
    patches = jnp.stack(cols, axis=3)                 # (N, Ho, Wo, 9, C)
    return patches.reshape(n * ho * wo, 9 * c), ho, wo


def fold_bn(gamma, beta, mean, var):
    scale = gamma / jnp.sqrt(var + EPS)
    shift = beta - mean * scale
    return scale.astype(jnp.float32), shift.astype(jnp.float32)


def _pad_cols(a, cp):
    return jnp.pad(a, ((0, 0), (0, cp - a.shape[1])))


def make_params(key, cin, cout, stride):
    ks = jax.random.split(key, 16)
    p = {
        "w1": 0.1 * jax.random.normal(ks[0], (3, 3, cin, cout), jnp.float32),   # HWIO
        "w2": 0.1 * jax.random.normal(ks[1], (3, 3, cout, cout), jnp.float32),
        "g1": jax.random.uniform(ks[2], (cout,), jnp.float32, 0.5, 1.5),
        "b1": 0.1 * jax.random.normal(ks[3], (cout,), jnp.float32),
        "m1": 0.1 * jax.random.normal(ks[4], (cout,), jnp.float32),
        "v1": jax.random.uniform(ks[5], (cout,), jnp.float32, 0.5, 1.5),
        "g2": jax.random.uniform(ks[6], (cout,), jnp.float32, 0.5, 1.5),
        "b2": 0.1 * jax.random.normal(ks[7], (cout,), jnp.float32),
        "m2": 0.1 * jax.random.normal(ks[8], (cout,), jnp.float32),
        "v2": jax.random.uniform(ks[9], (cout,), jnp.float32, 0.5, 1.5),
    }
    if stride != 1 or cin != cout:                    # projection shortcut only
        p["wsc"] = 0.1 * jax.random.normal(ks[10], (cin, cout), jnp.float32)    # 1x1
        p["gsc"] = jax.random.uniform(ks[11], (cout,), jnp.float32, 0.5, 1.5)
        p["bsc"] = 0.1 * jax.random.normal(ks[12], (cout,), jnp.float32)
        p["msc"] = 0.1 * jax.random.normal(ks[13], (cout,), jnp.float32)
        p["vsc"] = jax.random.uniform(ks[14], (cout,), jnp.float32, 0.5, 1.5)
    return p


# ---------------------------------------------------------------------------
# Forward pass (equivalent to ResidualBlock.forward, BN in eval mode)
# ---------------------------------------------------------------------------
def residual_block_forward(x_nchw, params, stride):
    x = jnp.transpose(x_nchw, (0, 2, 3, 1)).astype(jnp.float32)   # -> NHWC
    n, h, w, cin = x.shape
    cout = params["w1"].shape[-1]
    cp = _round_up(cout, LANE)                        # lane-dense padded channels

    # conv1 + bn1 + Mish  (BN scale folded into weight columns)
    s1, sh1 = fold_bn(params["g1"], params["b1"], params["m1"], params["v1"])
    w1f = _pad_cols(params["w1"].reshape(9 * cin, cout) * s1[None, :], cp)
    sh1p = _pad_cols(sh1[None, :], cp)
    p1, ho, wo = im2col_3x3(x, stride)
    y1 = fused_matmul_shift_mish(p1.astype(jnp.bfloat16),
                                 w1f.astype(jnp.bfloat16), sh1p,
                                 out_dtype=jnp.bfloat16)
    y1 = y1[:, :cout].reshape(n, ho, wo, cout)        # drop channel padding

    # conv2 + bn2 + shortcut + add + Mish
    s2, sh2 = fold_bn(params["g2"], params["b2"], params["m2"], params["v2"])
    w2f = params["w2"].reshape(9 * cout, cout) * s2[None, :]
    p2, _, _ = im2col_3x3(y1, 1)                      # already bf16
    m_rows = n * ho * wo

    if "wsc" in params:
        # Projection shortcut: fold its BN scale into Wsc and merge with the
        # main conv into ONE matmul via K-concatenation.
        ssc, bsc = fold_bn(params["gsc"], params["bsc"], params["msc"], params["vsc"])
        wscf = params["wsc"] * ssc[None, :]
        w_cat = _pad_cols(jnp.concatenate([w2f, wscf], axis=0), cp)
        shift_cat = _pad_cols((sh2 + bsc)[None, :], cp)
        sc_in = x[:, ::stride, ::stride, :].reshape(m_rows, cin)
        p_cat = jnp.concatenate([p2, sc_in.astype(jnp.bfloat16)], axis=1)
        out = fused_matmul_shift_mish(p_cat, w_cat.astype(jnp.bfloat16),
                                      shift_cat, out_dtype=jnp.float32)
    else:
        # Identity shortcut: no matmul, exact f32 residual add inside kernel.
        w2p = _pad_cols(w2f, cp)
        sh2p = _pad_cols(sh2[None, :], cp)
        sc_in = _pad_cols(x.reshape(m_rows, cin), cp)
        out = fused_matmul_shift_mish(p2, w2p.astype(jnp.bfloat16), sh2p,
                                      out_dtype=jnp.float32, shortcut_f32=sc_in)

    out = out[:, :cout].reshape(n, ho, wo, cout)
    return jnp.transpose(out, (0, 3, 1, 2))           # back to NCHW


# ---------------------------------------------------------------------------
# Pure-JAX f32 reference (lax.conv) for a correctness check
# ---------------------------------------------------------------------------
def _mish_ref(x):
    sp = jnp.where(x > 20.0, x, jnp.log1p(jnp.exp(jnp.minimum(x, 20.0))))
    return x * jnp.tanh(sp)


def reference_forward(x_nchw, params, stride):
    x = jnp.transpose(x_nchw, (0, 2, 3, 1)).astype(jnp.float32)
    dn = ("NHWC", "HWIO", "NHWC")

    def bn(y, g, b, m, v):
        return (y - m) / jnp.sqrt(v + EPS) * g + b

    out = jax.lax.conv_general_dilated(x, params["w1"], (stride, stride),
                                       ((1, 1), (1, 1)), dimension_numbers=dn)
    out = _mish_ref(bn(out, params["g1"], params["b1"], params["m1"], params["v1"]))
    out = jax.lax.conv_general_dilated(out, params["w2"], (1, 1),
                                       ((1, 1), (1, 1)), dimension_numbers=dn)
    out = bn(out, params["g2"], params["b2"], params["m2"], params["v2"])
    if "wsc" in params:
        wsc4 = params["wsc"][None, None, :, :]
        sc = jax.lax.conv_general_dilated(x, wsc4, (stride, stride),
                                          ((0, 0), (0, 0)), dimension_numbers=dn)
        sc = bn(sc, params["gsc"], params["bsc"], params["msc"], params["vsc"])
    else:
        sc = x
    out = _mish_ref(out + sc)
    return jnp.transpose(out, (0, 3, 1, 2))


if __name__ == "__main__":
    key = jax.random.PRNGKey(0)
    k_x, k_p, k_x2, k_p2 = jax.random.split(key, 4)

    # Case 1: projection shortcut (stride=2, cin != cout) -> merged-matmul kernel.
    N, C_IN, C_OUT, HW, STRIDE = 2, 4, 8, 16, 2
    x = jax.random.normal(k_x, (N, C_IN, HW, HW), jnp.float32)     # PyTorch NCHW
    params = make_params(k_p, C_IN, C_OUT, STRIDE)
    out = jax.block_until_ready(residual_block_forward(x, params, STRIDE))
    ref = jax.block_until_ready(reference_forward(x, params, STRIDE))
    assert out.shape == (N, C_OUT, HW // STRIDE, HW // STRIDE), out.shape
    assert jnp.allclose(out, ref, atol=5e-2, rtol=5e-2), \
        float(jnp.max(jnp.abs(out - ref)))   # bf16 MXU inputs -> loosened tol

    # Case 2: identity shortcut (stride=1, cin == cout) -> residual-add kernel.
    x2 = jax.random.normal(k_x2, (N, C_OUT, HW, HW), jnp.float32)
    params2 = make_params(k_p2, C_OUT, C_OUT, 1)
    out2 = jax.block_until_ready(residual_block_forward(x2, params2, 1))
    ref2 = jax.block_until_ready(reference_forward(x2, params2, 1))
    assert out2.shape == (N, C_OUT, HW, HW), out2.shape
    assert jnp.allclose(out2, ref2, atol=5e-2, rtol=5e-2), \
        float(jnp.max(jnp.abs(out2 - ref2)))

    print("KERNEL_OK")
</pallas_src>

<mosaic_0001>
module attributes {stable_mosaic.version = 11 : i64} {
  func.func @_matmul_shift_mish_kernel(%arg0: i32, %arg1: memref<128x36xbf16, #tpu.memory_space<vmem>>, %arg2: memref<36x128xbf16, #tpu.memory_space<vmem>>, %arg3: memref<1x128xf32, #tpu.memory_space<vmem>>, %arg4: memref<128x128xbf16, #tpu.memory_space<vmem>>) attributes {dimension_semantics = [#tpu.dimension_semantics<parallel>], iteration_bounds = array<i64: 1>, scalar_prefetch = 0 : i64, scratch_operands = 0 : i64, tpu.core_type = #tpu.core_type<tc>, window_params = [{transform_indices = @transform_0, window_bounds = array<i64: 128, 36>}, {pipeline_mode = #tpu.pipeline_mode<synchronous>, transform_indices = @transform_1, window_bounds = array<i64: 36, 128>}, {pipeline_mode = #tpu.pipeline_mode<synchronous>, transform_indices = @transform_2, window_bounds = array<i64: 1, 128>}, {transform_indices = @transform_3, window_bounds = array<i64: 128, 128>}]} {
    %c0 = arith.constant 0 : index
    %c0_0 = arith.constant 0 : index
    %0 = vector.load %arg1[%c0, %c0_0] : memref<128x36xbf16, #tpu.memory_space<vmem>>, vector<128x36xbf16>
    %c0_1 = arith.constant 0 : index
    %c0_2 = arith.constant 0 : index
    %1 = vector.load %arg2[%c0_1, %c0_2] : memref<36x128xbf16, #tpu.memory_space<vmem>>, vector<36x128xbf16>
    %cst = arith.constant dense<0.000000e+00> : vector<128x128xf32>
    %2 = tpu.matmul %0, %1, %cst {dimension_numbers = #tpu.dot_dimension_numbers<[1], [0], [0], [1], [0, 0, 1, 1], [], []>} : vector<128x36xbf16>, vector<36x128xbf16>, vector<128x128xf32> -> vector<128x128xf32>
    %c0_3 = arith.constant 0 : index
    %c0_4 = arith.constant 0 : index
    %3 = vector.load %arg3[%c0_3, %c0_4] : memref<1x128xf32, #tpu.memory_space<vmem>>, vector<1x128xf32>
    %4 = vector.broadcast %3 : vector<1x128xf32> to vector<128x128xf32>
    %5 = arith.addf %2, %4 : vector<128x128xf32>
    %cst_5 = arith.constant 2.000000e+01 : f32
    %6 = vector.broadcast %cst_5 : f32 to vector<128x128xf32>
    %7 = arith.minimumf %5, %6 : vector<128x128xf32>
    %8 = math.exp %7 : vector<128x128xf32>
    %cst_6 = arith.constant 2.000000e+00 : f32
    %9 = vector.broadcast %cst_6 : f32 to vector<128x128xf32>
    %10 = arith.addf %8, %9 : vector<128x128xf32>
    %11 = arith.mulf %8, %10 : vector<128x128xf32>
    %12 = arith.mulf %5, %11 : vector<128x128xf32>
    %cst_7 = arith.constant 2.000000e+00 : f32
    %13 = vector.broadcast %cst_7 : f32 to vector<128x128xf32>
    %14 = arith.addf %11, %13 : vector<128x128xf32>
    %15 = tpu.reciprocal %14 {approx = true} : vector<128x128xf32> -> vector<128x128xf32>
    %16 = arith.mulf %12, %15 : vector<128x128xf32>
    %cst_8 = arith.constant 2.000000e+01 : f32
    %17 = vector.broadcast %cst_8 : f32 to vector<128x128xf32>
    %18 = arith.cmpf ogt, %5, %17 : vector<128x128xf32>
    %19 = arith.select %18, %5, %16 : vector<128x128xi1>, vector<128x128xf32>
    %20 = arith.truncf %19 : vector<128x128xf32> to vector<128x128xbf16>
    %c0_9 = arith.constant 0 : index
    %c0_10 = arith.constant 0 : index
    %21 = vector.load %arg4[%c0_9, %c0_10] : memref<128x128xbf16, #tpu.memory_space<vmem>>, vector<128x128xbf16>
    tpu.vector_store %arg4[%c0_9, %c0_10], %20 {strides = array<i32>} : memref<128x128xbf16, #tpu.memory_space<vmem>>, vector<128x128xbf16>,
    return
  }
  func.func @transform_0(%arg0: i32) -> (i32, i32) {
    %c0_i32 = arith.constant 0 : i32
    %c0_i32_0 = arith.constant 0 : i32
    return %arg0, %c0_i32 : i32, i32
  }
  func.func @transform_1(%arg0: i32) -> (i32, i32) {
    %c0_i32 = arith.constant 0 : i32
    %c0_i32_0 = arith.constant 0 : i32
    %c0_i32_1 = arith.constant 0 : i32
    return %c0_i32, %c0_i32_0 : i32, i32
  }
  func.func @transform_2(%arg0: i32) -> (i32, i32) {
    %c0_i32 = arith.constant 0 : i32
    %c0_i32_0 = arith.constant 0 : i32
    %c0_i32_1 = arith.constant 0 : i32
    return %c0_i32, %c0_i32_0 : i32, i32
  }
  func.func @transform_3(%arg0: i32) -> (i32, i32) {
    %c0_i32 = arith.constant 0 : i32
    %c0_i32_0 = arith.constant 0 : i32
    return %arg0, %c0_i32 : i32, i32
  }
}

</mosaic_0001>

<llo_original>
// kernel: tpu_custom_call.1
$region0: #{tpu_custom_call.1}
  #allocation0 [shape = 'u32[]', space=smem, size = 0x4, offset = 0x4, fixed_abs, tag = 'smem constant byte address 0x4 - core index']
  #allocation1 [shape = 'u32[144,128]{1,0:T(1,128)}', space=vmem, size = 0x12000, scoped, tag = 'internal scratch']
  %s0 = inlined_call_operand.vmem [shape: bf16[128,36], index: 0, kind: input, shape index: {}]
  %s1 = inlined_call_operand.vmem [shape: bf16[36,128], index: 1, kind: input, shape index: {}]
  %s2 = inlined_call_operand.vmem [shape: f32[1,128], index: 2, kind: input, shape index: {}]
  %s3 = inlined_call_operand.hbm [shape: bf16[128,128], index: 3, kind: output, shape index: {}]
  %s4 = sld [smem:[#allocation0]]
  $region22: #{tpu_custom_call.1} parent=0
    _
  %s6 = ssub.s32 1, %s4
  %s7 = scalar_select 0, %s6, %s4
  $region1: #{tpu_custom_call.1} parent=0
    #allocation2 [shape = 'u8[32768]{0}', space=vmem, size = 0x8000, scoped, tag = 'output window, operand 0, single buffered']
    #allocation3 [shape = 's32[1]{0}', space=sflag, size = 0x4, scoped, tag = 'scoped memory for tpu_custom_call.1']
    %8 = vsyncpa [#allocation3], 0
    // Predicated region
    $region2: #{tpu_custom_call.1} parent=1 // pred_check
      _
    $region3: #{tpu_custom_call.1} parent=1 // pred_check_branch
      %10 = sbr.rel (0) target = $region5
    $region4: #{tpu_custom_call.1} parent=1 // pred_region
      _
    $region5: #{tpu_custom_call.1} parent=1 // pred_fallthru
      _
    // Predicated region
    $region6: #{tpu_custom_call.1} parent=1 // pred_check
      _
    $region7: #{tpu_custom_call.1} parent=1 // pred_check_branch
      %12 = sbr.rel (0) target = $region9
    $region8: #{tpu_custom_call.1} parent=1 // pred_region
      _
    $region9: #{tpu_custom_call.1} parent=1 // pred_fallthru
      _
    // Predicated region
    $region10: #{tpu_custom_call.1} parent=1 // pred_check
      _
    $region11: #{tpu_custom_call.1} parent=1 // pred_check_branch
      %14 = sbr.rel (0) target = $region13
    $region12: #{tpu_custom_call.1} parent=1 // pred_region
      _
    $region13: #{tpu_custom_call.1} parent=1 // pred_fallthru
      _
    %v16 = vld [vmem:[%s0] sm:$0xf]
    %v17 = vld [vmem:[%s0 + $0x4] sm:$0xf]
    %v18 = vld [vmem:[%s0 + $0x8] sm:$0xf]
    %v19 = vld [vmem:[%s0 + $0xc] sm:$0xf]
    %v20 = vld [vmem:[%s0 + $0x10] sm:$0xf]
    %v21 = vld [vmem:[%s0 + $0x14] sm:$0xf]
    %v22 = vld [vmem:[%s0 + $0x18] sm:$0xf]
    %v23 = vld [vmem:[%s0 + $0x1c] sm:$0xf]
    %v24 = vld [vmem:[%s0 + $0x20] sm:$0xf]
    %v25 = vld [vmem:[%s0 + $0x24] sm:$0xf]
    %v26 = vld [vmem:[%s0 + $0x28] sm:$0xf]
    %v27 = vld [vmem:[%s0 + $0x2c] sm:$0xf]
    %v28 = vld [vmem:[%s0 + $0x30] sm:$0xf]
    %v29 = vld [vmem:[%s0 + $0x34] sm:$0xf]
    %v30 = vld [vmem:[%s0 + $0x38] sm:$0xf]
    %v31 = vld [vmem:[%s0 + $0x3c] sm:$0xf]
    %v32 = vld [vmem:[%s1] sm:$0xf]
    %v33 = vld [vmem:[%s1 + $0x4] sm:$0xf]
    %v34 = vld [vmem:[%s1 + $0x8] sm:$0xf]
    %v35 = vld [vmem:[%s1 + $0xc] sm:$0xf]
    %v36 = vld [vmem:[%s1 + $0x10] sm:$0x3]
    %v37 = vld [vmem:[%s2] sm:$0x1]
    %v39 = vlaneseq
    %v40 = vshrl.u32 %v39, 7
    %v41 = vsub.s32 0, %v40
    %v42 = vrot.slane %v37, %v41
    %v60 = vunpack.c.l.b16 %v16
    %v61 = vunpack.c.l.b16 %v17
    %v62 = vunpack.c.l.b16 %v18
    %v63 = vunpack.c.l.b16 %v19
    %v64 = vunpack.c.l.b16 %v20
    %v65 = vunpack.c.l.b16 %v21
    %v66 = vunpack.c.l.b16 %v22
    %v67 = vunpack.c.l.b16 %v23
    %v68 = vunpack.c.l.b16 %v24
    %v69 = vunpack.c.l.b16 %v25
    %v70 = vunpack.c.l.b16 %v26
    %v71 = vunpack.c.l.b16 %v27
    %v72 = vunpack.c.l.b16 %v28
    %v73 = vunpack.c.l.b16 %v29
    %v74 = vunpack.c.l.b16 %v30
    %v75 = vunpack.c.l.b16 %v31
    %v76 = vpack.c.b16 %v61, %v60
    %v77 = vpack.c.b16 %v63, %v62
    %v78 = vpack.c.b16 %v65, %v64
    %v79 = vpack.c.b16 %v67, %v66
    %v80 = vpack.c.b16 %v69, %v68
    %v81 = vpack.c.b16 %v71, %v70
    %v82 = vpack.c.b16 %v73, %v72
    %v83 = vpack.c.b16 %v75, %v74
    %v89 = vunpack.c.l.b16 %v32
    %v90 = vunpack.c.l.b16 %v33
    %v91 = vunpack.c.l.b16 %v34
    %v92 = vunpack.c.l.b16 %v35
    %v93 = vunpack.c.l.b16 %v36
    %v94 = vpack.c.b16 %v90, %v89
    %v95 = vpack.c.b16 %v92, %v91
    %v96 = vpack.c.b16 %v93, %v93
    %vm99 = vcmask 293888
    %v101 = vsel %vm99, %v76, 0
    %v104 = vsel %vm99, %v77, 0
    %v107 = vsel %vm99, %v78, 0
    %v110 = vsel %vm99, %v79, 0
    %v113 = vsel %vm99, %v80, 0
    %v116 = vsel %vm99, %v81, 0
    %v119 = vsel %vm99, %v82, 0
    %v122 = vsel %vm99, %v83, 0
    %vm124 = vcmask 1041408
    %v126 = vsel %vm124, %v96, 0
    %128 = vmatprep.subr.bf16.mxu0 0
    %129 = vmatpush1.bf16.msra.mxu0 0
    %130 = vmatprep.subr.bf16.mxu0 0
    %131 = vmatpush1.bf16.msra.mxu0 0
    %132 = vmatprep.subr.bf16.mxu0 0
    %133 = vmatpush1.bf16.msra.mxu0 0
    %134 = vmatprep.subr.bf16.mxu0 0
    %135 = vmatpush1.bf16.msra.mxu0 0
    %136 = vmatprep.subr.bf16.mxu0 0
    %137 = vmatpush1.bf16.msra.mxu0 0
    %138 = vmatprep.subr.bf16.mxu0 0
    %139 = vmatpush1.bf16.msra.mxu0 %v126
    %140 = vmatprep.subr.bf16.mxu0 0
    %141 = vmatpush1.bf16.msra.mxu0 %v95
    %142 = vmatprep.subr.bf16.mxu0 0
    %143 = vmatpush1.bf16.msra.mxu0 %v94
    %144 = vmatprep.subr.bf16.mxu0 0
    %145 = vmatpush2.bf16.msra.mxu0 0
    %146 = vmatprep.subr.bf16.mxu0 0
    %147 = vmatpush2.bf16.msra.mxu0 0
    %148 = vmatprep.subr.bf16.mxu0 0
    %149 = vmatpush2.bf16.msra.mxu0 0
    %150 = vmatprep.subr.bf16.mxu0 0
    %151 = vmatpush2.bf16.msra.mxu0 0
    %152 = vmatprep.subr.bf16.mxu0 0
    %153 = vmatpush2.bf16.msra.mxu0 0
    %154 = vmatprep.subr.bf16.mxu0 0
    %155 = vmatpush2.bf16.msra.mxu0 0
    %156 = vmatprep.subr.bf16.mxu0 0
    %157 = vmatpush2.bf16.msra.mxu0 0
    %158 = vmatprep.subr.bf16.mxu0 0
    %159 = vmatpush2.bf16.msra.mxu0 0
    %160 = vmatprep.mubr.bf16.mxu0 0
    %161 = vmatmul.mubr.bf16.gmra.mxu0 %v101
    %v162 = vpop.f32.mrf.mxu0
    %v163 = vadd.f32 %v42, %v162
    %v164 = vpop.f32.mrf.mxu0
    %v165 = vpop.f32.mrf.mxu0
    %v166 = vadd.f32 %v42, %v165
    %v167 = vpop.f32.mrf.mxu0
    %168 = vmatprep.mubr.bf16.mxu0 0
    %169 = vmatmul.mubr.bf16.gmra.mxu0 %v104
    %v170 = vpop.f32.mrf.mxu0
    %v171 = vadd.f32 %v42, %v170
    %v172 = vpop.f32.mrf.mxu0
    %v173 = vpop.f32.mrf.mxu0
    %v174 = vadd.f32 %v42, %v173
    %v175 = vpop.f32.mrf.mxu0
    %176 = vmatprep.mubr.bf16.mxu0 0
    %177 = vmatmul.mubr.bf16.gmra.mxu0 %v107
    %v178 = vpop.f32.mrf.mxu0
    %v179 = vadd.f32 %v42, %v178
    %v180 = vpop.f32.mrf.mxu0
    %v181 = vpop.f32.mrf.mxu0
    %v182 = vadd.f32 %v42, %v181
    %v183 = vpop.f32.mrf.mxu0
    %184 = vmatprep.mubr.bf16.mxu0 0
    %185 = vmatmul.mubr.bf16.gmra.mxu0 %v110
    %v186 = vpop.f32.mrf.mxu0
    %v187 = vadd.f32 %v42, %v186
    %v188 = vpop.f32.mrf.mxu0
    %v189 = vpop.f32.mrf.mxu0
    %v190 = vadd.f32 %v42, %v189
    %v191 = vpop.f32.mrf.mxu0
    %192 = vmatprep.mubr.bf16.mxu0 0
    %193 = vmatmul.mubr.bf16.gmra.mxu0 %v113
    %v194 = vpop.f32.mrf.mxu0
    %v195 = vadd.f32 %v42, %v194
    %v196 = vpop.f32.mrf.mxu0
    %v197 = vpop.f32.mrf.mxu0
    %v198 = vadd.f32 %v42, %v197
    %v199 = vpop.f32.mrf.mxu0
    %200 = vmatprep.mubr.bf16.mxu0 0
    %201 = vmatmul.mubr.bf16.gmra.mxu0 %v116
    %v202 = vpop.f32.mrf.mxu0
    %v203 = vadd.f32 %v42, %v202
    %v204 = vpop.f32.mrf.mxu0
    %v205 = vpop.f32.mrf.mxu0
    %v206 = vadd.f32 %v42, %v205
    %v207 = vpop.f32.mrf.mxu0
    %208 = vmatprep.mubr.bf16.mxu0 0
    %209 = vmatmul.mubr.bf16.gmra.mxu0 %v119
    %v210 = vpop.f32.mrf.mxu0
    %v211 = vadd.f32 %v42, %v210
    %v212 = vpop.f32.mrf.mxu0
    %v213 = vpop.f32.mrf.mxu0
    %v214 = vadd.f32 %v42, %v213
    %v215 = vpop.f32.mrf.mxu0
    %216 = vmatprep.mubr.bf16.mxu0 0
    %217 = vmatmul.mubr.bf16.gmra.mxu0 %v122
    %v218 = vpop.f32.mrf.mxu0
    %v219 = vadd.f32 %v42, %v218
    %v220 = vpop.f32.mrf.mxu0
    %v221 = vpop.f32.mrf.mxu0
    %v222 = vadd.f32 %v42, %v221
    %v223 = vpop.f32.mrf.mxu0
    %224 = vdwg.mxu0
    %v225 = vmin.f32 %v163, 20.0
    %v226 = vmin.f32 %v166, 20.0
    %v227 = vmin.f32 %v171, 20.0
    %v228 = vmin.f32 %v174, 20.0
    %v229 = vmin.f32 %v179, 20.0
    %v230 = vmin.f32 %v182, 20.0
    %v231 = vmin.f32 %v187, 20.0
    %v232 = vmin.f32 %v190, 20.0
    %v233 = vmin.f32 %v195, 20.0
    %v234 = vmin.f32 %v198, 20.0
    %v235 = vmin.f32 %v203, 20.0
    %v236 = vmin.f32 %v206, 20.0
    %v237 = vmin.f32 %v211, 20.0
    %v238 = vmin.f32 %v214, 20.0
    %v239 = vmin.f32 %v219, 20.0
    %v240 = vmin.f32 %v222, 20.0
    %v241 = vmul.f32 %v225, 1.442695
    %v242 = vpow.pop %v241
    %v243 = vmul.f32 %v226, 1.442695
    %v244 = vpow.pop %v243
    %v245 = vmul.f32 %v227, 1.442695
    %v246 = vpow.pop %v245
    %v247 = vmul.f32 %v228, 1.442695
    %v248 = vpow.pop %v247
    %v249 = vmul.f32 %v229, 1.442695
    %v250 = vpow.pop %v249
    %v251 = vmul.f32 %v230, 1.442695
    %v252 = vpow.pop %v251
    %v253 = vmul.f32 %v231, 1.442695
    %v254 = vpow.pop %v253
    %v255 = vmul.f32 %v232, 1.442695
    %v256 = vpow.pop %v255
    %v257 = vmul.f32 %v233, 1.442695
    %v258 = vpow.pop %v257
    %v259 = vmul.f32 %v234, 1.442695
    %v260 = vpow.pop %v259
    %v261 = vmul.f32 %v235, 1.442695
    %v262 = vpow.pop %v261
    %v263 = vmul.f32 %v236, 1.442695
    %v264 = vpow.pop %v263
    %v265 = vmul.f32 %v237, 1.442695
    %v266 = vpow.pop %v265
    %v267 = vmul.f32 %v238, 1.442695
    %v268 = vpow.pop %v267
    %v269 = vmul.f32 %v239, 1.442695
    %v270 = vpow.pop %v269
    %v271 = vmul.f32 %v240, 1.442695
    %v272 = vpow.pop %v271
    %v273 = vadd.f32 %v242, 2.0
    %v274 = vadd.f32 %v244, 2.0
    %v275 = vadd.f32 %v246, 2.0
    %v276 = vadd.f32 %v248, 2.0
    %v277 = vadd.f32 %v250, 2.0
    %v278 = vadd.f32 %v252, 2.0
    %v279 = vadd.f32 %v254, 2.0
    %v280 = vadd.f32 %v256, 2.0
    %v281 = vadd.f32 %v258, 2.0
    %v282 = vadd.f32 %v260, 2.0
    %v283 = vadd.f32 %v262, 2.0
    %v284 = vadd.f32 %v264, 2.0
    %v285 = vadd.f32 %v266, 2.0
    %v286 = vadd.f32 %v268, 2.0
    %v287 = vadd.f32 %v270, 2.0
    %v288 = vadd.f32 %v272, 2.0
    %v289 = vmul.f32 %v242, %v273
    %v290 = vmul.f32 %v244, %v274
    %v291 = vmul.f32 %v246, %v275
    %v292 = vmul.f32 %v248, %v276
    %v293 = vmul.f32 %v250, %v277
    %v294 = vmul.f32 %v252, %v278
    %v295 = vmul.f32 %v254, %v279
    %v296 = vmul.f32 %v256, %v280
    %v297 = vmul.f32 %v258, %v281
    %v298 = vmul.f32 %v260, %v282
    %v299 = vmul.f32 %v262, %v283
    %v300 = vmul.f32 %v264, %v284
    %v301 = vmul.f32 %v266, %v285
    %v302 = vmul.f32 %v268, %v286
    %v303 = vmul.f32 %v270, %v287
    %v304 = vmul.f32 %v272, %v288
    %v305 = vmul.f32 %v163, %v289
    %v306 = vmul.f32 %v166, %v290
    %v307 = vmul.f32 %v171, %v291
    %v308 = vmul.f32 %v174, %v292
    %v309 = vmul.f32 %v179, %v293
    %v310 = vmul.f32 %v182, %v294
    %v311 = vmul.f32 %v187, %v295
    %v312 = vmul.f32 %v190, %v296
    %v313 = vmul.f32 %v195, %v297
    %v314 = vmul.f32 %v198, %v298
    %v315 = vmul.f32 %v203, %v299
    %v316 = vmul.f32 %v206, %v300
    %v317 = vmul.f32 %v211, %v301
    %v318 = vmul.f32 %v214, %v302
    %v319 = vmul.f32 %v219, %v303
    %v320 = vmul.f32 %v222, %v304
    %v321 = vadd.f32 %v289, 2.0
    %v322 = vadd.f32 %v290, 2.0
    %v323 = vadd.f32 %v291, 2.0
    %v324 = vadd.f32 %v292, 2.0
    %v325 = vadd.f32 %v293, 2.0
    %v326 = vadd.f32 %v294, 2.0
    %v327 = vadd.f32 %v295, 2.0
    %v328 = vadd.f32 %v296, 2.0
    %v329 = vadd.f32 %v297, 2.0
    %v330 = vadd.f32 %v298, 2.0
    %v331 = vadd.f32 %v299, 2.0
    %v332 = vadd.f32 %v300, 2.0
    %v333 = vadd.f32 %v301, 2.0
    %v334 = vadd.f32 %v302, 2.0
    %v335 = vadd.f32 %v303, 2.0
    %v336 = vadd.f32 %v304, 2.0
    %v337 = vrcp.pop %v321
    %v338 = vrcp.pop %v322
    %v339 = vrcp.pop %v323
    %v340 = vrcp.pop %v324
    %v341 = vrcp.pop %v325
    %v342 = vrcp.pop %v326
    %v343 = vrcp.pop %v327
    %v344 = vrcp.pop %v328
    %v345 = vrcp.pop %v329
    %v346 = vrcp.pop %v330
    %v347 = vrcp.pop %v331
    %v348 = vrcp.pop %v332
    %v349 = vrcp.pop %v333
    %v350 = vrcp.pop %v334
    %v351 = vrcp.pop %v335
    %v352 = vrcp.pop %v336
    %v353 = vmul.f32 %v305, %v337
    %v354 = vmul.f32 %v306, %v338
    %v355 = vmul.f32 %v307, %v339
    %v356 = vmul.f32 %v308, %v340
    %v357 = vmul.f32 %v309, %v341
    %v358 = vmul.f32 %v310, %v342
    %v359 = vmul.f32 %v311, %v343
    %v360 = vmul.f32 %v312, %v344
    %v361 = vmul.f32 %v313, %v345
    %v362 = vmul.f32 %v314, %v346
    %v363 = vmul.f32 %v315, %v347
    %v364 = vmul.f32 %v316, %v348
    %v365 = vmul.f32 %v317, %v349
    %v366 = vmul.f32 %v318, %v350
    %v367 = vmul.f32 %v319, %v351
    %v368 = vmul.f32 %v320, %v352
    %vm369 = vcmp.gt.f32.partialorder %v163, 20.0
    %vm370 = vcmp.gt.f32.partialorder %v166, 20.0
    %vm371 = vcmp.gt.f32.partialorder %v171, 20.0
    %vm372 = vcmp.gt.f32.partialorder %v174, 20.0
    %vm373 = vcmp.gt.f32.partialorder %v179, 20.0
    %vm374 = vcmp.gt.f32.partialorder %v182, 20.0
    %vm375 = vcmp.gt.f32.partialorder %v187, 20.0
    %vm376 = vcmp.gt.f32.partialorder %v190, 20.0
    %vm377 = vcmp.gt.f32.partialorder %v195, 20.0
    %vm378 = vcmp.gt.f32.partialorder %v198, 20.0
    %vm379 = vcmp.gt.f32.partialorder %v203, 20.0
    %vm380 = vcmp.gt.f32.partialorder %v206, 20.0
    %vm381 = vcmp.gt.f32.partialorder %v211, 20.0
    %vm382 = vcmp.gt.f32.partialorder %v214, 20.0
    %vm383 = vcmp.gt.f32.partialorder %v219, 20.0
    %vm384 = vcmp.gt.f32.partialorder %v222, 20.0
    %v385 = vsel %vm369, %v163, %v353
    %v386 = vsel %vm370, %v166, %v354
    %v387 = vsel %vm371, %v171, %v355
    %v388 = vsel %vm372, %v174, %v356
    %v389 = vsel %vm373, %v179, %v357
    %v390 = vsel %vm374, %v182, %v358
    %v391 = vsel %vm375, %v187, %v359
    %v392 = vsel %vm376, %v190, %v360
    %v393 = vsel %vm377, %v195, %v361
    %v394 = vsel %vm378, %v198, %v362
    %v395 = vsel %vm379, %v203, %v363
    %v396 = vsel %vm380, %v206, %v364
    %v397 = vsel %vm381, %v211, %v365
    %v398 = vsel %vm382, %v214, %v366
    %v399 = vsel %vm383, %v219, %v367
    %v400 = vsel %vm384, %v222, %v368
    %v401 = vpack.c.bf16 %v386, %v385
    %v402 = vpack.c.bf16 %v388, %v387
    %v403 = vpack.c.bf16 %v390, %v389
    %v404 = vpack.c.bf16 %v392, %v391
    %v405 = vpack.c.bf16 %v394, %v393
    %v406 = vpack.c.bf16 %v396, %v395
    %v407 = vpack.c.bf16 %v398, %v397
    %v408 = vpack.c.bf16 %v400, %v399
    %v417 = vunpack.c.l.b16 %v401
    %v418 = vunpack.c.h.b16 %v401
    %v419 = vunpack.c.l.b16 %v402
    %v420 = vunpack.c.h.b16 %v402
    %v421 = vunpack.c.l.b16 %v403
    %v422 = vunpack.c.h.b16 %v403
    %v423 = vunpack.c.l.b16 %v404
    %v424 = vunpack.c.h.b16 %v404
    %v425 = vunpack.c.l.b16 %v405
    %v426 = vunpack.c.h.b16 %v405
    %v427 = vunpack.c.l.b16 %v406
    %v428 = vunpack.c.h.b16 %v406
    %v429 = vunpack.c.l.b16 %v407
    %v430 = vunpack.c.h.b16 %v407
    %v431 = vunpack.c.l.b16 %v408
    %v432 = vunpack.c.h.b16 %v408
    %v433 = vpack.c.b16 %v417, %v417
    %v434 = vpack.c.b16 %v418, %v418
    %v435 = vpack.c.b16 %v419, %v419
    %v436 = vpack.c.b16 %v420, %v420
    %v437 = vpack.c.b16 %v421, %v421
    %v438 = vpack.c.b16 %v422, %v422
    %v439 = vpack.c.b16 %v423, %v423
    %v440 = vpack.c.b16 %v424, %v424
    %v441 = vpack.c.b16 %v425, %v425
    %v442 = vpack.c.b16 %v426, %v426
    %v443 = vpack.c.b16 %v427, %v427
    %v444 = vpack.c.b16 %v428, %v428
    %v445 = vpack.c.b16 %v429, %v429
    %v446 = vpack.c.b16 %v430, %v430
    %v447 = vpack.c.b16 %v431, %v431
    %v448 = vpack.c.b16 %v432, %v432
    %465 = vst [vmem:[#allocation2] sm:$0xf] %v433
    %466 = vst [vmem:[#allocation2 + $0x4] sm:$0xf] %v434
    %467 = vst [vmem:[#allocation2 + $0x8] sm:$0xf] %v435
    %468 = vst [vmem:[#allocation2 + $0xc] sm:$0xf] %v436
    %469 = vst [vmem:[#allocation2 + $0x10] sm:$0xf] %v437
    %470 = vst [vmem:[#allocation2 + $0x14] sm:$0xf] %v438
    %471 = vst [vmem:[#allocation2 + $0x18] sm:$0xf] %v439
    %472 = vst [vmem:[#allocation2 + $0x1c] sm:$0xf] %v440
    %473 = vst [vmem:[#allocation2 + $0x20] sm:$0xf] %v441
    %474 = vst [vmem:[#allocation2 + $0x24] sm:$0xf] %v442
    %475 = vst [vmem:[#allocation2 + $0x28] sm:$0xf] %v443
    %476 = vst [vmem:[#allocation2 + $0x2c] sm:$0xf] %v444
    %477 = vst [vmem:[#allocation2 + $0x30] sm:$0xf] %v445
    %478 = vst [vmem:[#allocation2 + $0x34] sm:$0xf] %v446
    %479 = vst [vmem:[#allocation2 + $0x38] sm:$0xf] %v447
    %480 = vst [vmem:[#allocation2 + $0x3c] sm:$0xf] %v448
    // Predicated region
    $region14: #{tpu_custom_call.1} parent=1 // pred_check
      _
    $region15: #{tpu_custom_call.1} parent=1 // pred_check_branch
      %482 = sbr.rel (0) target = $region17
    $region16: #{tpu_custom_call.1} parent=1 // pred_region
      %s484 = ssub.s32 1024, 1024
      %485 = vsyncadd [#allocation3], %s484
      %s486 = sshll.u32 [#allocation2], 4
      %s487 = int_to_ptr.vmem [resolvable:$true] %s486
      %492 = dma.vmem_to_hbm [thread:$0]  %s487, 1024, %s3, [#allocation3], 64, 64, 4
    $region17: #{tpu_custom_call.1} parent=1 // pred_fallthru
      _
    // Predicated region
    $region18: #{tpu_custom_call.1} parent=1 // pred_check
      _
    $region19: #{tpu_custom_call.1} parent=1 // pred_check_branch
      %494 = sbr.rel (0) target = $region21
    $region20: #{tpu_custom_call.1} parent=1 // pred_region
      %495 = dma.done [#allocation3], 1024
    $region21: #{tpu_custom_call.1} parent=1 // pred_fallthru
      _
    %496 = vsyncpa [#allocation3], 1

</llo_original>
